<compile_context>
chip_gen: v7x
topology: tpu7x:2x2x1
jax: 0.10.0
libtpu: 0.0.40
codegen_flags: <defaults>
</compile_context>

<pallas_src>
import functools

import jax
import jax.numpy as jnp
from jax.experimental import pallas as pl
from jax.experimental.pallas import tpu as pltpu

LOW_THRESHOLD = 312.7
HIGH_THRESHOLD = 625.3
# class_weights = [1/3, 1/3, 1/3] in the PyTorch __init__ are unused in forward.

_LANE = 128
_TILE_ROWS = 1024          # (1024, 128) f32 tile = 512 KiB per input per buffer
_NUM_ACC = 5               # rows: total_sq, low_sq, med_sq, low_cnt, med_cnt


def _default_num_chunks():
    """Use 2 parallel grid chunks only on chips with two TensorCores (v7x)."""
    try:
        kind = jax.devices()[0].device_kind.lower()
    except Exception:
        return 1
    return 2 if ("v7" in kind or "tpu7" in kind or "tpu 7" in kind) else 1


def _equalized_mse_kernel(pred_ref, tgt_ref, out_ref, acc_ref, *,
                          n_rows, blocks_per_chunk):
    c = pl.program_id(0)                 # chunk (parallel axis)
    s = pl.program_id(1)                 # step within chunk (arbitrary axis)
    num_steps = pl.num_programs(1)

    @pl.when(s == 0)
    def _init():
        acc_ref[...] = jnp.zeros_like(acc_ref)

    pred = pred_ref[...].astype(jnp.float32)
    tgt = tgt_ref[...].astype(jnp.float32)
    tile_rows = pred.shape[0]

    # Unclamped logical block index; clamped duplicate tail steps of the
    # chunked grid get rows_left <= 0 and are fully masked out.
    block_idx = c * blocks_per_chunk + s
    rows_left = n_rows - block_idx * tile_rows

    sq_err = (pred - tgt) ** 2
    low_m = tgt <= LOW_THRESHOLD
    med_m = jnp.logical_and(tgt > LOW_THRESHOLD, tgt < HIGH_THRESHOLD)

    def _fold(total_sq, low_sq, med_sq, low_cnt, med_cnt):
        # In-register sublane reduction -> one tiny (128,) add per stream.
        acc_ref[0] += jnp.sum(total_sq, axis=0)
        acc_ref[1] += jnp.sum(low_sq, axis=0)
        acc_ref[2] += jnp.sum(med_sq, axis=0)
        acc_ref[3] += jnp.sum(low_cnt, axis=0)
        acc_ref[4] += jnp.sum(med_cnt, axis=0)

    @pl.when(rows_left >= tile_rows)
    def _full_block():                   # fast path: no iota / validity mask
        _fold(sq_err,
              jnp.where(low_m, sq_err, 0.0),
              jnp.where(med_m, sq_err, 0.0),
              low_m.astype(jnp.float32),
              med_m.astype(jnp.float32))

    @pl.when(rows_left < tile_rows)
    def _tail_block():                   # ragged tail / duplicate steps
        row_ids = jax.lax.broadcasted_iota(jnp.int32, sq_err.shape, 0)
        valid = row_ids < rows_left
        low_v = jnp.logical_and(low_m, valid)
        med_v = jnp.logical_and(med_m, valid)
        _fold(jnp.where(valid, sq_err, 0.0),
              jnp.where(low_v, sq_err, 0.0),
              jnp.where(med_v, sq_err, 0.0),
              low_v.astype(jnp.float32),
              med_v.astype(jnp.float32))

    @pl.when(s == num_steps - 1)
    def _finalize():
        out_ref[0] = acc_ref[...]


def equalized_mse_loss(predictions, targets, *, num_chunks=None,
                       tile_rows=_TILE_ROWS):
    """Pallas implementation of EqualizedMSELoss.forward. Returns f32 scalar."""
    pred_flat = predictions.reshape(-1)
    tgt_flat = targets.reshape(-1)
    n = pred_flat.shape[0]
    if n == 0:
        return jnp.float32(0.0)
    # TODO(synk): flat sizes >= 2**31 would need 64-bit count handling.

    n_rows = n // _LANE
    rem = n - n_rows * _LANE

    class_sums = jnp.zeros((3,), jnp.float32)
    class_counts = jnp.zeros((3,), jnp.int32)

    if n_rows > 0:
        n_main = n_rows * _LANE
        pred_main = pred_flat[:n_main] if rem else pred_flat
        tgt_main = tgt_flat[:n_main] if rem else tgt_flat
        pred_2d = pred_main.reshape(n_rows, _LANE)
        tgt_2d = tgt_main.reshape(n_rows, _LANE)

        tr = min(tile_rows, n_rows)
        num_row_blocks = -(-n_rows // tr)
        nc = _default_num_chunks() if num_chunks is None else num_chunks
        nc = max(1, min(nc, num_row_blocks))
        blocks_per_chunk = -(-num_row_blocks // nc)

        def in_map(c, s):
            # Clamp so duplicate tail steps read a valid block; the in-kernel
            # rows_left mask fully excludes their contribution.
            return (jnp.minimum(c * blocks_per_chunk + s, num_row_blocks - 1), 0)

        kernel = functools.partial(_equalized_mse_kernel, n_rows=n_rows,
                                   blocks_per_chunk=blocks_per_chunk)

        partials = pl.pallas_call(
            kernel,
            out_shape=jax.ShapeDtypeStruct((nc, _NUM_ACC, _LANE), jnp.float32),
            grid_spec=pltpu.PrefetchScalarGridSpec(
                num_scalar_prefetch=0,
                grid=(nc, blocks_per_chunk),
                in_specs=[pl.BlockSpec((tr, _LANE), in_map),
                          pl.BlockSpec((tr, _LANE), in_map)],
                out_specs=pl.BlockSpec((1, _NUM_ACC, _LANE),
                                       lambda c, s: (c, 0, 0)),
                scratch_shapes=[pltpu.VMEM((_NUM_ACC, _LANE), jnp.float32)],
            ),
            compiler_params=pltpu.CompilerParams(
                dimension_semantics=("parallel", "arbitrary")),
        )(pred_2d, tgt_2d)

        sums = jnp.sum(partials[:, 0:3, :], axis=(0, 2))          # (3,) f32
        total_sq, low_sq, med_sq = sums[0], sums[1], sums[2]
        high_sq = total_sq - low_sq - med_sq
        # Per-lane counts are exact f32 integers (< 2^24); combine exactly.
        low_cnt = jnp.sum(partials[:, 3, :].astype(jnp.int32))
        med_cnt = jnp.sum(partials[:, 4, :].astype(jnp.int32))
        high_cnt = jnp.int32(n_main) - low_cnt - med_cnt
        class_sums = class_sums + jnp.stack([low_sq, med_sq, high_sq])
        class_counts = class_counts + jnp.stack([low_cnt, med_cnt, high_cnt])

    if rem:
        # <128-element lane remainder: a few pure-JAX ops instead of a padded
        # full-array copy feeding the kernel.
        pt = pred_flat[n_rows * _LANE:].astype(jnp.float32)
        tt = tgt_flat[n_rows * _LANE:].astype(jnp.float32)
        se = (pt - tt) ** 2
        low_m = tt <= LOW_THRESHOLD
        med_m = (tt > LOW_THRESHOLD) & (tt < HIGH_THRESHOLD)
        high_m = tt >= HIGH_THRESHOLD
        class_sums = class_sums + jnp.stack([
            jnp.sum(jnp.where(low_m, se, 0.0)),
            jnp.sum(jnp.where(med_m, se, 0.0)),
            jnp.sum(jnp.where(high_m, se, 0.0))])
        class_counts = class_counts + jnp.stack([
            jnp.sum(low_m.astype(jnp.int32)),
            jnp.sum(med_m.astype(jnp.int32)),
            jnp.sum(high_m.astype(jnp.int32))])

    present = class_counts > 0
    per_class_mse = class_sums / jnp.maximum(class_counts, 1).astype(jnp.float32)
    loss = jnp.sum(jnp.where(present, per_class_mse, 0.0))
    n_present = jnp.sum(present.astype(jnp.float32))
    return jnp.where(n_present > 0.0,
                     loss / jnp.maximum(n_present, 1.0),
                     jnp.float32(0.0))


def _reference(predictions, targets):
    """Pure-JAX reference mirroring the PyTorch forward."""
    p = predictions.reshape(-1).astype(jnp.float32)
    t = targets.reshape(-1).astype(jnp.float32)
    se = (p - t) ** 2
    masks = [t <= LOW_THRESHOLD,
             (t > LOW_THRESHOLD) & (t < HIGH_THRESHOLD),
             t >= HIGH_THRESHOLD]
    loss = jnp.float32(0.0)
    cc = jnp.float32(0.0)
    for m in masks:
        mf = m.astype(jnp.float32)
        cnt = jnp.sum(mf)
        present = (cnt > 0).astype(jnp.float32)
        loss = loss + present * (jnp.sum(se * mf) / jnp.maximum(cnt, 1.0))
        cc = cc + present
    return jnp.where(cc > 0, loss / jnp.maximum(cc, 1.0), jnp.float32(0.0))


if __name__ == "__main__":
    key = jax.random.PRNGKey(0)
    keys = jax.random.split(key, 8)

    def check(pred, tgt, **kw):
        out = equalized_mse_loss(pred, tgt, **kw)
        jax.block_until_ready(out)
        ref = _reference(pred, tgt)
        assert jnp.allclose(out, ref, rtol=1e-4, atol=1e-4), (out, ref)

    # Case 1: small 4-D regression volume (the loss flattens it); all buckets hit.
    shape = (2, 4, 16, 16)
    t1 = jax.random.uniform(keys[0], shape, jnp.float32, 0.0, 900.0)
    p1 = t1 + 10.0 * jax.random.normal(keys[1], shape, jnp.float32)
    check(p1, t1)

    # Case 2: ragged 1-D input (lane remainder folded in the epilogue).
    n2 = 70_001
    t2 = jax.random.uniform(keys[2], (n2,), jnp.float32, 0.0, 900.0)
    p2 = t2 + 10.0 * jax.random.normal(keys[3], (n2,), jnp.float32)
    check(p2, t2)

    # Case 3: multi-block grid with a partial tail block, a clamped duplicate
    # step, and the 2-chunk parallel axis forced on.
    n3 = 2 * _TILE_ROWS * _LANE + 512 * _LANE + 37
    t3 = jax.random.uniform(keys[4], (n3,), jnp.float32, 0.0, 900.0)
    p3 = t3 + 10.0 * jax.random.normal(keys[5], (n3,), jnp.float32)
    check(p3, t3, num_chunks=2)

    # Case 4: only the low bucket is populated (presence logic).
    t4 = jax.random.uniform(keys[6], (8, 64), jnp.float32, 0.0, 100.0)
    p4 = t4 + jax.random.normal(keys[7], (8, 64), jnp.float32)
    check(p4, t4)

    # Case 5: input smaller than one lane row (pure-epilogue path).
    t5 = jnp.array([[100.0], [700.0]], jnp.float32)
    p5 = jnp.array([[110.0], [690.0]], jnp.float32)
    check(p5, t5)

    print("KERNEL_OK")
</pallas_src>

<mosaic_0001>
module attributes {stable_mosaic.version = 11 : i64} {
  func.func @_equalized_mse_kernel(%arg0: i32, %arg1: i32, %arg2: memref<16x128xf32, #tpu.memory_space<vmem>>, %arg3: memref<16x128xf32, #tpu.memory_space<vmem>>, %arg4: memref<1x5x128xf32, #tpu.memory_space<vmem>>, %arg5: memref<5x128xf32, #tpu.memory_space<vmem>>) attributes {dimension_semantics = [#tpu.dimension_semantics<parallel>, #tpu.dimension_semantics<arbitrary>], iteration_bounds = array<i64: 1, 1>, scalar_prefetch = 0 : i64, scratch_operands = 1 : i64, tpu.core_type = #tpu.core_type<tc>, window_params = [{transform_indices = @transform_0, window_bounds = array<i64: 16, 128>}, {transform_indices = @transform_1, window_bounds = array<i64: 16, 128>}, {transform_indices = @transform_2, window_bounds = array<i64: 1, 5, 128>}]} {
    %c0_i32 = arith.constant 0 : i32
    %0 = arith.cmpi eq, %arg1, %c0_i32 : i32
    %1 = arith.extui %0 : i1 to i32
    %c0_i32_0 = arith.constant 0 : i32
    %2 = arith.cmpi ne, %1, %c0_i32_0 : i32
    scf.if %2 {
      %cst_13 = arith.constant 0.000000e+00 : f32
      %27 = vector.broadcast %cst_13 : f32 to vector<5x128xf32>
      %c0_14 = arith.constant 0 : index
      %c0_15 = arith.constant 0 : index
      %28 = vector.load %arg5[%c0_14, %c0_15] : memref<5x128xf32, #tpu.memory_space<vmem>>, vector<5x128xf32>
      tpu.vector_store %arg5[%c0_14, %c0_15], %27 {strides = array<i32>} : memref<5x128xf32, #tpu.memory_space<vmem>>, vector<5x128xf32>,
    } else {
    }
    %c0 = arith.constant 0 : index
    %c0_1 = arith.constant 0 : index
    %3 = vector.load %arg2[%c0, %c0_1] : memref<16x128xf32, #tpu.memory_space<vmem>>, vector<16x128xf32>
    %c0_2 = arith.constant 0 : index
    %c0_3 = arith.constant 0 : index
    %4 = vector.load %arg3[%c0_2, %c0_3] : memref<16x128xf32, #tpu.memory_space<vmem>>, vector<16x128xf32>
    %c1_i32 = arith.constant 1 : i32
    %5 = arith.muli %arg0, %c1_i32 : i32
    %6 = arith.addi %5, %arg1 : i32
    %c16_i32 = arith.constant 16 : i32
    %7 = arith.muli %6, %c16_i32 : i32
    %c16_i32_4 = arith.constant 16 : i32
    %8 = arith.subi %c16_i32_4, %7 : i32
    %9 = arith.subf %3, %4 : vector<16x128xf32>
    %10 = arith.mulf %9, %9 : vector<16x128xf32>
    %cst = arith.constant 3.127000e+02 : f32
    %11 = vector.broadcast %cst : f32 to vector<16x128xf32>
    %12 = arith.cmpf ole, %4, %11 : vector<16x128xf32>
    %cst_5 = arith.constant 3.127000e+02 : f32
    %13 = vector.broadcast %cst_5 : f32 to vector<16x128xf32>
    %14 = arith.cmpf ogt, %4, %13 : vector<16x128xf32>
    %cst_6 = arith.constant 6.253000e+02 : f32
    %15 = vector.broadcast %cst_6 : f32 to vector<16x128xf32>
    %16 = arith.cmpf olt, %4, %15 : vector<16x128xf32>
    %17 = arith.andi %14, %16 : vector<16x128xi1>
    %c16_i32_7 = arith.constant 16 : i32
    %18 = arith.cmpi sge, %8, %c16_i32_7 : i32
    %19 = arith.extui %18 : i1 to i32
    %c0_i32_8 = arith.constant 0 : i32
    %20 = arith.cmpi ne, %19, %c0_i32_8 : i32
    scf.if %20 {
      %cst_13 = arith.constant 0.000000e+00 : f32
      %27 = vector.broadcast %cst_13 : f32 to vector<16x128xf32>
      %28 = arith.select %12, %10, %27 : vector<16x128xi1>, vector<16x128xf32>
      %cst_14 = arith.constant 0.000000e+00 : f32
      %29 = vector.broadcast %cst_14 : f32 to vector<16x128xf32>
      %30 = arith.select %17, %10, %29 : vector<16x128xi1>, vector<16x128xf32>
      %31 = arith.extui %12 : vector<16x128xi1> to vector<16x128xi32>
      %32 = arith.sitofp %31 : vector<16x128xi32> to vector<16x128xf32>
      %33 = arith.extui %17 : vector<16x128xi1> to vector<16x128xi32>
      %34 = arith.sitofp %33 : vector<16x128xi32> to vector<16x128xf32>
      %c0_15 = arith.constant 0 : index
      %c0_16 = arith.constant 0 : index
      %35 = vector.load %arg5[%c0_15, %c0_16] : memref<5x128xf32, #tpu.memory_space<vmem>>, vector<1x128xf32>
      %36 = vector.shape_cast %35 : vector<1x128xf32> to vector<128xf32>
      %cst_17 = arith.constant dense<0.000000e+00> : vector<128xf32>
      %37 = vector.multi_reduction <add>, %10, %cst_17 [0] : vector<16x128xf32> to vector<128xf32>
      %38 = arith.addf %36, %37 : vector<128xf32>
      %c0_18 = arith.constant 0 : index
      %c0_19 = arith.constant 0 : index
      %39 = vector.load %arg5[%c0_18, %c0_19] : memref<5x128xf32, #tpu.memory_space<vmem>>, vector<1x128xf32>
      %40 = vector.shape_cast %39 : vector<1x128xf32> to vector<128xf32>
      %41 = vector.shape_cast %38 : vector<128xf32> to vector<1x128xf32>
      tpu.vector_store %arg5[%c0_18, %c0_19], %41 {strides = array<i32>} : memref<5x128xf32, #tpu.memory_space<vmem>>, vector<1x128xf32>,
      %c1 = arith.constant 1 : index
      %c0_20 = arith.constant 0 : index
      %42 = vector.load %arg5[%c1, %c0_20] : memref<5x128xf32, #tpu.memory_space<vmem>>, vector<1x128xf32>
      %43 = vector.shape_cast %42 : vector<1x128xf32> to vector<128xf32>
      %cst_21 = arith.constant dense<0.000000e+00> : vector<128xf32>
      %44 = vector.multi_reduction <add>, %28, %cst_21 [0] : vector<16x128xf32> to vector<128xf32>
      %45 = arith.addf %43, %44 : vector<128xf32>
      %c1_22 = arith.constant 1 : index
      %c0_23 = arith.constant 0 : index
      %46 = vector.load %arg5[%c1_22, %c0_23] : memref<5x128xf32, #tpu.memory_space<vmem>>, vector<1x128xf32>
      %47 = vector.shape_cast %46 : vector<1x128xf32> to vector<128xf32>
      %48 = vector.shape_cast %45 : vector<128xf32> to vector<1x128xf32>
      tpu.vector_store %arg5[%c1_22, %c0_23], %48 {strides = array<i32>} : memref<5x128xf32, #tpu.memory_space<vmem>>, vector<1x128xf32>,
      %c2 = arith.constant 2 : index
      %c0_24 = arith.constant 0 : index
      %49 = vector.load %arg5[%c2, %c0_24] : memref<5x128xf32, #tpu.memory_space<vmem>>, vector<1x128xf32>
      %50 = vector.shape_cast %49 : vector<1x128xf32> to vector<128xf32>
      %cst_25 = arith.constant dense<0.000000e+00> : vector<128xf32>
      %51 = vector.multi_reduction <add>, %30, %cst_25 [0] : vector<16x128xf32> to vector<128xf32>
      %52 = arith.addf %50, %51 : vector<128xf32>
      %c2_26 = arith.constant 2 : index
      %c0_27 = arith.constant 0 : index
      %53 = vector.load %arg5[%c2_26, %c0_27] : memref<5x128xf32, #tpu.memory_space<vmem>>, vector<1x128xf32>
      %54 = vector.shape_cast %53 : vector<1x128xf32> to vector<128xf32>
      %55 = vector.shape_cast %52 : vector<128xf32> to vector<1x128xf32>
      tpu.vector_store %arg5[%c2_26, %c0_27], %55 {strides = array<i32>} : memref<5x128xf32, #tpu.memory_space<vmem>>, vector<1x128xf32>,
      %c3 = arith.constant 3 : index
      %c0_28 = arith.constant 0 : index
      %56 = vector.load %arg5[%c3, %c0_28] : memref<5x128xf32, #tpu.memory_space<vmem>>, vector<1x128xf32>
      %57 = vector.shape_cast %56 : vector<1x128xf32> to vector<128xf32>
      %cst_29 = arith.constant dense<0.000000e+00> : vector<128xf32>
      %58 = vector.multi_reduction <add>, %32, %cst_29 [0] : vector<16x128xf32> to vector<128xf32>
      %59 = arith.addf %57, %58 : vector<128xf32>
      %c3_30 = arith.constant 3 : index
      %c0_31 = arith.constant 0 : index
      %60 = vector.load %arg5[%c3_30, %c0_31] : memref<5x128xf32, #tpu.memory_space<vmem>>, vector<1x128xf32>
      %61 = vector.shape_cast %60 : vector<1x128xf32> to vector<128xf32>
      %62 = vector.shape_cast %59 : vector<128xf32> to vector<1x128xf32>
      tpu.vector_store %arg5[%c3_30, %c0_31], %62 {strides = array<i32>} : memref<5x128xf32, #tpu.memory_space<vmem>>, vector<1x128xf32>,
      %c4 = arith.constant 4 : index
      %c0_32 = arith.constant 0 : index
      %63 = vector.load %arg5[%c4, %c0_32] : memref<5x128xf32, #tpu.memory_space<vmem>>, vector<1x128xf32>
      %64 = vector.shape_cast %63 : vector<1x128xf32> to vector<128xf32>
      %cst_33 = arith.constant dense<0.000000e+00> : vector<128xf32>
      %65 = vector.multi_reduction <add>, %34, %cst_33 [0] : vector<16x128xf32> to vector<128xf32>
      %66 = arith.addf %64, %65 : vector<128xf32>
      %c4_34 = arith.constant 4 : index
      %c0_35 = arith.constant 0 : index
      %67 = vector.load %arg5[%c4_34, %c0_35] : memref<5x128xf32, #tpu.memory_space<vmem>>, vector<1x128xf32>
      %68 = vector.shape_cast %67 : vector<1x128xf32> to vector<128xf32>
      %69 = vector.shape_cast %66 : vector<128xf32> to vector<1x128xf32>
      tpu.vector_store %arg5[%c4_34, %c0_35], %69 {strides = array<i32>} : memref<5x128xf32, #tpu.memory_space<vmem>>, vector<1x128xf32>,
    } else {
    }
    %c16_i32_9 = arith.constant 16 : i32
    %21 = arith.cmpi slt, %8, %c16_i32_9 : i32
    %22 = arith.extui %21 : i1 to i32
    %c0_i32_10 = arith.constant 0 : i32
    %23 = arith.cmpi ne, %22, %c0_i32_10 : i32
    scf.if %23 {
      %27 = tpu.iota {dimensions = array<i32: 0>} : vector<16x128xi32>
      %28 = vector.broadcast %8 : i32 to vector<16x128xi32>
      %29 = arith.cmpi slt, %27, %28 : vector<16x128xi32>
      %30 = arith.andi %12, %29 : vector<16x128xi1>
      %31 = arith.andi %17, %29 : vector<16x128xi1>
      %cst_13 = arith.constant 0.000000e+00 : f32
      %32 = vector.broadcast %cst_13 : f32 to vector<16x128xf32>
      %33 = arith.select %29, %10, %32 : vector<16x128xi1>, vector<16x128xf32>
      %cst_14 = arith.constant 0.000000e+00 : f32
      %34 = vector.broadcast %cst_14 : f32 to vector<16x128xf32>
      %35 = arith.select %30, %10, %34 : vector<16x128xi1>, vector<16x128xf32>
      %cst_15 = arith.constant 0.000000e+00 : f32
      %36 = vector.broadcast %cst_15 : f32 to vector<16x128xf32>
      %37 = arith.select %31, %10, %36 : vector<16x128xi1>, vector<16x128xf32>
      %38 = arith.extui %30 : vector<16x128xi1> to vector<16x128xi32>
      %39 = arith.sitofp %38 : vector<16x128xi32> to vector<16x128xf32>
      %40 = arith.extui %31 : vector<16x128xi1> to vector<16x128xi32>
      %41 = arith.sitofp %40 : vector<16x128xi32> to vector<16x128xf32>
      %c0_16 = arith.constant 0 : index
      %c0_17 = arith.constant 0 : index
      %42 = vector.load %arg5[%c0_16, %c0_17] : memref<5x128xf32, #tpu.memory_space<vmem>>, vector<1x128xf32>
      %43 = vector.shape_cast %42 : vector<1x128xf32> to vector<128xf32>
      %cst_18 = arith.constant dense<0.000000e+00> : vector<128xf32>
      %44 = vector.multi_reduction <add>, %33, %cst_18 [0] : vector<16x128xf32> to vector<128xf32>
      %45 = arith.addf %43, %44 : vector<128xf32>
      %c0_19 = arith.constant 0 : index
      %c0_20 = arith.constant 0 : index
      %46 = vector.load %arg5[%c0_19, %c0_20] : memref<5x128xf32, #tpu.memory_space<vmem>>, vector<1x128xf32>
      %47 = vector.shape_cast %46 : vector<1x128xf32> to vector<128xf32>
      %48 = vector.shape_cast %45 : vector<128xf32> to vector<1x128xf32>
      tpu.vector_store %arg5[%c0_19, %c0_20], %48 {strides = array<i32>} : memref<5x128xf32, #tpu.memory_space<vmem>>, vector<1x128xf32>,
      %c1 = arith.constant 1 : index
      %c0_21 = arith.constant 0 : index
      %49 = vector.load %arg5[%c1, %c0_21] : memref<5x128xf32, #tpu.memory_space<vmem>>, vector<1x128xf32>
      %50 = vector.shape_cast %49 : vector<1x128xf32> to vector<128xf32>
      %cst_22 = arith.constant dense<0.000000e+00> : vector<128xf32>
      %51 = vector.multi_reduction <add>, %35, %cst_22 [0] : vector<16x128xf32> to vector<128xf32>
      %52 = arith.addf %50, %51 : vector<128xf32>
      %c1_23 = arith.constant 1 : index
      %c0_24 = arith.constant 0 : index
      %53 = vector.load %arg5[%c1_23, %c0_24] : memref<5x128xf32, #tpu.memory_space<vmem>>, vector<1x128xf32>
      %54 = vector.shape_cast %53 : vector<1x128xf32> to vector<128xf32>
      %55 = vector.shape_cast %52 : vector<128xf32> to vector<1x128xf32>
      tpu.vector_store %arg5[%c1_23, %c0_24], %55 {strides = array<i32>} : memref<5x128xf32, #tpu.memory_space<vmem>>, vector<1x128xf32>,
      %c2 = arith.constant 2 : index
      %c0_25 = arith.constant 0 : index
      %56 = vector.load %arg5[%c2, %c0_25] : memref<5x128xf32, #tpu.memory_space<vmem>>, vector<1x128xf32>
      %57 = vector.shape_cast %56 : vector<1x128xf32> to vector<128xf32>
      %cst_26 = arith.constant dense<0.000000e+00> : vector<128xf32>
      %58 = vector.multi_reduction <add>, %37, %cst_26 [0] : vector<16x128xf32> to vector<128xf32>
      %59 = arith.addf %57, %58 : vector<128xf32>
      %c2_27 = arith.constant 2 : index
      %c0_28 = arith.constant 0 : index
      %60 = vector.load %arg5[%c2_27, %c0_28] : memref<5x128xf32, #tpu.memory_space<vmem>>, vector<1x128xf32>
      %61 = vector.shape_cast %60 : vector<1x128xf32> to vector<128xf32>
      %62 = vector.shape_cast %59 : vector<128xf32> to vector<1x128xf32>
      tpu.vector_store %arg5[%c2_27, %c0_28], %62 {strides = array<i32>} : memref<5x128xf32, #tpu.memory_space<vmem>>, vector<1x128xf32>,
      %c3 = arith.constant 3 : index
      %c0_29 = arith.constant 0 : index
      %63 = vector.load %arg5[%c3, %c0_29] : memref<5x128xf32, #tpu.memory_space<vmem>>, vector<1x128xf32>
      %64 = vector.shape_cast %63 : vector<1x128xf32> to vector<128xf32>
      %cst_30 = arith.constant dense<0.000000e+00> : vector<128xf32>
      %65 = vector.multi_reduction <add>, %39, %cst_30 [0] : vector<16x128xf32> to vector<128xf32>
      %66 = arith.addf %64, %65 : vector<128xf32>
      %c3_31 = arith.constant 3 : index
      %c0_32 = arith.constant 0 : index
      %67 = vector.load %arg5[%c3_31, %c0_32] : memref<5x128xf32, #tpu.memory_space<vmem>>, vector<1x128xf32>
      %68 = vector.shape_cast %67 : vector<1x128xf32> to vector<128xf32>
      %69 = vector.shape_cast %66 : vector<128xf32> to vector<1x128xf32>
      tpu.vector_store %arg5[%c3_31, %c0_32], %69 {strides = array<i32>} : memref<5x128xf32, #tpu.memory_space<vmem>>, vector<1x128xf32>,
      %c4 = arith.constant 4 : index
      %c0_33 = arith.constant 0 : index
      %70 = vector.load %arg5[%c4, %c0_33] : memref<5x128xf32, #tpu.memory_space<vmem>>, vector<1x128xf32>
      %71 = vector.shape_cast %70 : vector<1x128xf32> to vector<128xf32>
      %cst_34 = arith.constant dense<0.000000e+00> : vector<128xf32>
      %72 = vector.multi_reduction <add>, %41, %cst_34 [0] : vector<16x128xf32> to vector<128xf32>
      %73 = arith.addf %71, %72 : vector<128xf32>
      %c4_35 = arith.constant 4 : index
      %c0_36 = arith.constant 0 : index
      %74 = vector.load %arg5[%c4_35, %c0_36] : memref<5x128xf32, #tpu.memory_space<vmem>>, vector<1x128xf32>
      %75 = vector.shape_cast %74 : vector<1x128xf32> to vector<128xf32>
      %76 = vector.shape_cast %73 : vector<128xf32> to vector<1x128xf32>
      tpu.vector_store %arg5[%c4_35, %c0_36], %76 {strides = array<i32>} : memref<5x128xf32, #tpu.memory_space<vmem>>, vector<1x128xf32>,
    } else {
    }
    %c0_i32_11 = arith.constant 0 : i32
    %24 = arith.cmpi eq, %arg1, %c0_i32_11 : i32
    %25 = arith.extui %24 : i1 to i32
    %c0_i32_12 = arith.constant 0 : i32
    %26 = arith.cmpi ne, %25, %c0_i32_12 : i32
    scf.if %26 {
      %c0_13 = arith.constant 0 : index
      %c0_14 = arith.constant 0 : index
      %27 = vector.load %arg5[%c0_13, %c0_14] : memref<5x128xf32, #tpu.memory_space<vmem>>, vector<5x128xf32>
      %c0_15 = arith.constant 0 : index
      %c0_16 = arith.constant 0 : index
      %c0_17 = arith.constant 0 : index
      %28 = vector.load %arg4[%c0_15, %c0_16, %c0_17] : memref<1x5x128xf32, #tpu.memory_space<vmem>>, vector<1x5x128xf32>
      %29 = vector.shape_cast %28 : vector<1x5x128xf32> to vector<5x128xf32>
      %30 = vector.shape_cast %27 : vector<5x128xf32> to vector<1x5x128xf32>
      tpu.vector_store %arg4[%c0_15, %c0_16, %c0_17], %30 {strides = array<i32>} : memref<1x5x128xf32, #tpu.memory_space<vmem>>, vector<1x5x128xf32>,
    } else {
    }
    return
  }
  func.func @transform_0(%arg0: i32, %arg1: i32) -> (i32, i32) {
    %c1_i32 = arith.constant 1 : i32
    %0 = arith.muli %arg0, %c1_i32 : i32
    %1 = arith.addi %0, %arg1 : i32
    %c0_i32 = arith.constant 0 : i32
    %2 = arith.minsi %1, %c0_i32 : i32
    %c0_i32_0 = arith.constant 0 : i32
    %c0_i32_1 = arith.constant 0 : i32
    return %2, %c0_i32_0 : i32, i32
  }
  func.func @transform_1(%arg0: i32, %arg1: i32) -> (i32, i32) {
    %c1_i32 = arith.constant 1 : i32
    %0 = arith.muli %arg0, %c1_i32 : i32
    %1 = arith.addi %0, %arg1 : i32
    %c0_i32 = arith.constant 0 : i32
    %2 = arith.minsi %1, %c0_i32 : i32
    %c0_i32_0 = arith.constant 0 : i32
    %c0_i32_1 = arith.constant 0 : i32
    return %2, %c0_i32_0 : i32, i32
  }
  func.func @transform_2(%arg0: i32, %arg1: i32) -> (i32, i32, i32) {
    %c0_i32 = arith.constant 0 : i32
    %c0_i32_0 = arith.constant 0 : i32
    %c0_i32_1 = arith.constant 0 : i32
    return %arg0, %c0_i32, %c0_i32_0 : i32, i32, i32
  }
}

</mosaic_0001>

<llo_original>
// kernel: tpu_custom_call.1
$region0: #{tpu_custom_call.1}
  #allocation0 [shape = 'u32[]', space=smem, size = 0x4, offset = 0x4, fixed_abs, tag = 'smem constant byte address 0x4 - core index']
  #allocation1 [shape = 'u32[144,128]{1,0:T(1,128)}', space=vmem, size = 0x12000, scoped, tag = 'internal scratch']
  #allocation2 [shape = 'f32[5,128]{1,0:T(8,128)}', space=vmem, size = 0x1000, scoped, tag = 'scratch operand']
  %s0 = inlined_call_operand.hbm [shape: f32[16,128], index: 0, kind: input, shape index: {}]
  %s1 = inlined_call_operand.hbm [shape: f32[16,128], index: 1, kind: input, shape index: {}]
  %s2 = inlined_call_operand.vmem [shape: f32[1,5,128], index: 2, kind: output, shape index: {}]
  %s3 = sld [smem:[#allocation0]]
  $region42: #{tpu_custom_call.1} parent=0
    _
  %s5 = ssub.s32 1, %s3
  %s6 = scalar_select 0, %s5, %s3
  $region1: #{tpu_custom_call.1} parent=0
    #allocation3 [shape = 'u8[8192]{0}', space=vmem, size = 0x2000, scoped, tag = 'input window, operand 0, single buffered']
    #allocation4 [shape = 's32[1]{0}', space=sflag, size = 0x4, scoped, tag = 'scoped memory for tpu_custom_call.1']
    #allocation5 [shape = 'u8[8192]{0}', space=vmem, size = 0x2000, scoped, tag = 'input window, operand 1, single buffered']
    #allocation6 [shape = 's32[1]{0}', space=sflag, size = 0x4, scoped, tag = 'scoped memory for tpu_custom_call.1']
    %7 = vsyncpa [#allocation4], 0
    %8 = vsyncpa [#allocation6], 0
    // Predicated region
    $region2: #{tpu_custom_call.1} parent=1 // pred_check
      _
    $region3: #{tpu_custom_call.1} parent=1 // pred_check_branch
      %10 = sbr.rel (0) target = $region5
    $region4: #{tpu_custom_call.1} parent=1 // pred_region
      %s11 = sadd.s32 0, 0
      %p12 = scmp.lt.s32.totalorder %s11, 0
      %s13 = scalar_select %p12, %s11, 0
      %s14 = smul.u32 2, %s13
      %s16 = ssub.s32 256, 256
      %17 = vsyncadd [#allocation4], %s16
      %s18 = smul.addr %s14, 128
      %s19 = scalar_lea.hbm %s0, %s18
      %s20 = sshll.u32 [#allocation3], 4
      %s21 = int_to_ptr.vmem [resolvable:$true] %s20
      %26 = dma.hbm_to_vmem [thread:$0]  %s19, 256, %s21, [#allocation4], 128, 128, 8
    $region5: #{tpu_custom_call.1} parent=1 // pred_fallthru
      _
    // Predicated region
    $region6: #{tpu_custom_call.1} parent=1 // pred_check
      _
    $region7: #{tpu_custom_call.1} parent=1 // pred_check_branch
      %28 = sbr.rel (0) target = $region9
    $region8: #{tpu_custom_call.1} parent=1 // pred_region
      %s29 = sadd.s32 0, 0
      %p30 = scmp.lt.s32.totalorder %s29, 0
      %s31 = scalar_select %p30, %s29, 0
      %s32 = smul.u32 2, %s31
      %s34 = ssub.s32 256, 256
      %35 = vsyncadd [#allocation6], %s34
      %s36 = smul.addr %s32, 128
      %s37 = scalar_lea.hbm %s1, %s36
      %s38 = sshll.u32 [#allocation5], 4
      %s39 = int_to_ptr.vmem [resolvable:$true] %s38
      %44 = dma.hbm_to_vmem [thread:$0]  %s37, 256, %s39, [#allocation6], 128, 128, 8
    $region9: #{tpu_custom_call.1} parent=1 // pred_fallthru
      _
    // Predicated region
    $region10: #{tpu_custom_call.1} parent=1 // pred_check
      _
    $region11: #{tpu_custom_call.1} parent=1 // pred_check_branch
      %46 = sbr.rel (0) target = $region13
    $region12: #{tpu_custom_call.1} parent=1 // pred_region
      %47 = dma.done [#allocation4], 256
    $region13: #{tpu_custom_call.1} parent=1 // pred_fallthru
      _
    // Predicated region
    $region14: #{tpu_custom_call.1} parent=1 // pred_check
      _
    $region15: #{tpu_custom_call.1} parent=1 // pred_check_branch
      %49 = sbr.rel (0) target = $region17
    $region16: #{tpu_custom_call.1} parent=1 // pred_region
      %50 = dma.done [#allocation6], 256
    $region17: #{tpu_custom_call.1} parent=1 // pred_fallthru
      _
    %s51 = sadd.s32 0, 0
    %p52 = scmp.lt.s32.totalorder %s51, 0
    %s53 = scalar_select %p52, %s51, 0
    %s54 = smul.u32 2, %s53
    %s55 = sadd.s32 0, 0
    %p56 = scmp.lt.s32.totalorder %s55, 0
    %s57 = scalar_select %p56, %s55, 0
    %s58 = smul.u32 2, %s57
    %p59 = scmp.eq.s32.totalorder 0, 0
    // Predicated region
    $region18: #{tpu_custom_call.1} parent=1 // pred_check
      %p60 = pneg %p59
    $region19: #{tpu_custom_call.1} parent=1 // pred_check_branch
      %62 = sbr.rel (%p60) target = $region21
    $region20: #{tpu_custom_call.1} parent=1 // pred_region
      %63 = vst [vmem:[#allocation2] sm:$0x1f] 0.0
    $region21: #{tpu_custom_call.1} parent=1 // pred_fallthru
      _
    %v64 = vld [vmem:[#allocation3] sm:$0xff]
    %v65 = vld [vmem:[#allocation3 + $0x8] sm:$0xff]
    %v66 = vld [vmem:[#allocation5] sm:$0xff]
    %v67 = vld [vmem:[#allocation5 + $0x8] sm:$0xff]
    %s68 = sadd.s32 0, 0
    %s69 = smul.u32 %s68, 16
    %s70 = ssub.s32 16, %s69
    %v71 = vsub.f32 %v64, %v66
    %v72 = vsub.f32 %v65, %v67
    %v73 = vmul.f32 %v71, %v71
    %v74 = vmul.f32 %v72, %v72
    %vm75 = vcmp.le.f32.partialorder %v66, 312.7
    %vm76 = vcmp.le.f32.partialorder %v67, 312.7
    %vm77 = vcmp.gt.f32.partialorder %v66, 312.7
    %vm78 = vcmp.gt.f32.partialorder %v67, 312.7
    %vm79 = vcmp.lt.f32.partialorder %v66, 625.3
    %vm80 = vcmp.lt.f32.partialorder %v67, 625.3
    %vm81 = vmand %vm77, %vm79
    %vm82 = vmand %vm78, %vm80
    %p83 = scmp.ge.s32.totalorder %s70, 16
    // Predicated region
    $region22: #{tpu_custom_call.1} parent=1 // pred_check
      %p84 = pneg %p83
    $region23: #{tpu_custom_call.1} parent=1 // pred_check_branch
      %86 = sbr.rel (%p84) target = $region25
    $region24: #{tpu_custom_call.1} parent=1 // pred_region
      %v87 = vsel %vm75, %v73, 0.0
      %v88 = vsel %vm76, %v74, 0.0
      %v89 = vsel %vm81, %v73, 0.0
      %v90 = vsel %vm82, %v74, 0.0
      %v91 = vsel %vm75, 1, 0
      %v92 = vsel %vm76, 1, 0
      %v93 = vcvt.s32.f32 %v91
      %v94 = vcvt.s32.f32 %v92
      %v95 = vsel %vm81, 1, 0
      %v96 = vsel %vm82, 1, 0
      %v97 = vcvt.s32.f32 %v95
      %v98 = vcvt.s32.f32 %v96
      %v99 = vld [vmem:[#allocation2] sm:$0x1]
      %v100 = vadd.f32 %v73, %v74
      %v101 = vrot.slane %v100, 4
      %v102 = vadd.f32 %v100, %v101
      %v103 = vrot.slane %v102, 2
      %v104 = vadd.f32 %v102, %v103
      %v105 = vrot.slane %v104, 1
      %v106 = vadd.f32 %v104, %v105
      %v107 = vadd.f32 %v99, %v106
      %108 = vst [vmem:[#allocation2] sm:$0x1] %v107
      %v109 = vld [vmem:[#allocation2 + $0x1] sm:$0x1]
      %v110 = vadd.f32 %v87, %v88
      %v111 = vrot.slane %v110, 4
      %v112 = vadd.f32 %v110, %v111
      %v113 = vrot.slane %v112, 2
      %v114 = vadd.f32 %v112, %v113
      %v115 = vrot.slane %v114, 1
      %v116 = vadd.f32 %v114, %v115
      %v117 = vadd.f32 %v109, %v116
      %118 = vst [vmem:[#allocation2 + $0x1] sm:$0x1] %v117
      %v119 = vld [vmem:[#allocation2 + $0x2] sm:$0x1]
      %v120 = vadd.f32 %v89, %v90
      %v121 = vrot.slane %v120, 4
      %v122 = vadd.f32 %v120, %v121
      %v123 = vrot.slane %v122, 2
      %v124 = vadd.f32 %v122, %v123
      %v125 = vrot.slane %v124, 1
      %v126 = vadd.f32 %v124, %v125
      %v127 = vadd.f32 %v119, %v126
      %128 = vst [vmem:[#allocation2 + $0x2] sm:$0x1] %v127
      %v129 = vld [vmem:[#allocation2 + $0x3] sm:$0x1]
      %v130 = vadd.f32 %v93, %v94
      %v131 = vrot.slane %v130, 4
      %v132 = vadd.f32 %v130, %v131
      %v133 = vrot.slane %v132, 2
      %v134 = vadd.f32 %v132, %v133
      %v135 = vrot.slane %v134, 1
      %v136 = vadd.f32 %v134, %v135
      %v137 = vadd.f32 %v129, %v136
      %138 = vst [vmem:[#allocation2 + $0x3] sm:$0x1] %v137
      %v139 = vld [vmem:[#allocation2 + $0x4] sm:$0x1]
      %v140 = vadd.f32 %v97, %v98
      %v141 = vrot.slane %v140, 4
      %v142 = vadd.f32 %v140, %v141
      %v143 = vrot.slane %v142, 2
      %v144 = vadd.f32 %v142, %v143
      %v145 = vrot.slane %v144, 1
      %v146 = vadd.f32 %v144, %v145
      %v147 = vadd.f32 %v139, %v146
      %148 = vst [vmem:[#allocation2 + $0x4] sm:$0x1] %v147
    $region25: #{tpu_custom_call.1} parent=1 // pred_fallthru
      _
    %p149 = scmp.lt.s32.totalorder %s70, 16
    // Predicated region
    $region26: #{tpu_custom_call.1} parent=1 // pred_check
      %p150 = pneg %p149
    $region27: #{tpu_custom_call.1} parent=1 // pred_check_branch
      %152 = sbr.rel (%p150) target = $region29
    $region28: #{tpu_custom_call.1} parent=1 // pred_region
      %v153 = vlaneseq
      %v154 = vshrl.u32 %v153, 7
      %v155 = vadd.s32 %v154, 8
      %v156 = vstv %s70
      %vm157 = vcmp.lt.s32.totalorder %v154, %v156
      %vm158 = vcmp.lt.s32.totalorder %v155, %v156
      %vm159 = vmand %vm75, %vm157
      %vm160 = vmand %vm76, %vm158
      %vm161 = vmand %vm81, %vm157
      %vm162 = vmand %vm82, %vm158
      %v163 = vsel %vm157, %v73, 0.0
      %v164 = vsel %vm158, %v74, 0.0
      %v165 = vsel %vm159, %v73, 0.0
      %v166 = vsel %vm160, %v74, 0.0
      %v167 = vsel %vm161, %v73, 0.0
      %v168 = vsel %vm162, %v74, 0.0
      %v169 = vsel %vm159, 1, 0
      %v170 = vsel %vm160, 1, 0
      %v171 = vcvt.s32.f32 %v169
      %v172 = vcvt.s32.f32 %v170
      %v173 = vsel %vm161, 1, 0
      %v174 = vsel %vm162, 1, 0
      %v175 = vcvt.s32.f32 %v173
      %v176 = vcvt.s32.f32 %v174
      %v177 = vld [vmem:[#allocation2] sm:$0x1]
      %v178 = vadd.f32 %v163, %v164
      %v179 = vrot.slane %v178, 4
      %v180 = vadd.f32 %v178, %v179
      %v181 = vrot.slane %v180, 2
      %v182 = vadd.f32 %v180, %v181
      %v183 = vrot.slane %v182, 1
      %v184 = vadd.f32 %v182, %v183
      %v185 = vadd.f32 %v177, %v184
      %186 = vst [vmem:[#allocation2] sm:$0x1] %v185
      %v187 = vld [vmem:[#allocation2 + $0x1] sm:$0x1]
      %v188 = vadd.f32 %v165, %v166
      %v189 = vrot.slane %v188, 4
      %v190 = vadd.f32 %v188, %v189
      %v191 = vrot.slane %v190, 2
      %v192 = vadd.f32 %v190, %v191
      %v193 = vrot.slane %v192, 1
      %v194 = vadd.f32 %v192, %v193
      %v195 = vadd.f32 %v187, %v194
      %196 = vst [vmem:[#allocation2 + $0x1] sm:$0x1] %v195
      %v197 = vld [vmem:[#allocation2 + $0x2] sm:$0x1]
      %v198 = vadd.f32 %v167, %v168
      %v199 = vrot.slane %v198, 4
      %v200 = vadd.f32 %v198, %v199
      %v201 = vrot.slane %v200, 2
      %v202 = vadd.f32 %v200, %v201
      %v203 = vrot.slane %v202, 1
      %v204 = vadd.f32 %v202, %v203
      %v205 = vadd.f32 %v197, %v204
      %206 = vst [vmem:[#allocation2 + $0x2] sm:$0x1] %v205
      %v207 = vld [vmem:[#allocation2 + $0x3] sm:$0x1]
      %v208 = vadd.f32 %v171, %v172
      %v209 = vrot.slane %v208, 4
      %v210 = vadd.f32 %v208, %v209
      %v211 = vrot.slane %v210, 2
      %v212 = vadd.f32 %v210, %v211
      %v213 = vrot.slane %v212, 1
      %v214 = vadd.f32 %v212, %v213
      %v215 = vadd.f32 %v207, %v214
      %216 = vst [vmem:[#allocation2 + $0x3] sm:$0x1] %v215
      %v217 = vld [vmem:[#allocation2 + $0x4] sm:$0x1]
      %v218 = vadd.f32 %v175, %v176
      %v219 = vrot.slane %v218, 4
      %v220 = vadd.f32 %v218, %v219
      %v221 = vrot.slane %v220, 2
      %v222 = vadd.f32 %v220, %v221
      %v223 = vrot.slane %v222, 1
      %v224 = vadd.f32 %v222, %v223
      %v225 = vadd.f32 %v217, %v224
      %226 = vst [vmem:[#allocation2 + $0x4] sm:$0x1] %v225
    $region29: #{tpu_custom_call.1} parent=1 // pred_fallthru
      _
    // Predicated region
    $region30: #{tpu_custom_call.1} parent=1 // pred_check
      %p227 = pneg %p59
    $region31: #{tpu_custom_call.1} parent=1 // pred_check_branch
      %229 = sbr.rel (%p227) target = $region33
    $region32: #{tpu_custom_call.1} parent=1 // pred_region
      %v230 = vld [vmem:[#allocation2] sm:$0x1f]
      %231 = vst [vmem:[%s2] sm:$0x1f] %v230
    $region33: #{tpu_custom_call.1} parent=1 // pred_fallthru
      _
    // Predicated region
    $region34: #{tpu_custom_call.1} parent=1 // pred_check
      _
    $region35: #{tpu_custom_call.1} parent=1 // pred_check_branch
      %233 = sbr.rel (0) target = $region37
    $region36: #{tpu_custom_call.1} parent=1 // pred_region
      _
    $region37: #{tpu_custom_call.1} parent=1 // pred_fallthru
      _
    // Predicated region
    $region38: #{tpu_custom_call.1} parent=1 // pred_check
      _
    $region39: #{tpu_custom_call.1} parent=1 // pred_check_branch
      %235 = sbr.rel (0) target = $region41
    $region40: #{tpu_custom_call.1} parent=1 // pred_region
      _
    $region41: #{tpu_custom_call.1} parent=1 // pred_fallthru
      _
    %236 = vsyncpa [#allocation4], 1
    %237 = vsyncpa [#allocation6], 1

</llo_original>
